<compile_context>
chip_gen: v7x
topology: tpu7x:2x2x1
jax: 0.10.0
libtpu: 0.0.40
codegen_flags: <defaults>
</compile_context>

<pallas_src>
import math

import jax
import jax.numpy as jnp
from jax.experimental import pallas as pl
from jax.experimental.pallas import tpu as pltpu

_INV_SQRT2 = 1.0 / math.sqrt(2.0)


def _mlp_kernel(x_ref, w1_ref, b1_ref, w2_ref, b2_ref, o_ref, acc_ref):
    kh = pl.program_id(1)

    # Init the f32 accumulator on the first H chunk of this token tile.
    @pl.when(kh == 0)
    def _():
        acc_ref[...] = jnp.zeros_like(acc_ref)

    # fc1 partial: bf16 matmul on the MXU, f32 accumulation, f32 bias add.
    x = x_ref[...].astype(jnp.bfloat16)
    h = jnp.dot(x, w1_ref[...], preferred_element_type=jnp.float32)
    h = h + b1_ref[...]

    # Exact (erf-based) GELU in f32 — matches torch.nn.GELU() default.
    h = 0.5 * h * (1.0 + jax.lax.erf(h * _INV_SQRT2))

    # fc2 partial: bf16 matmul, accumulate into the f32 scratch.
    acc_ref[...] += jnp.dot(h.astype(jnp.bfloat16), w2_ref[...],
                            preferred_element_type=jnp.float32)

    # Finalize on the last H chunk: add fc2 bias and store the tile.
    # Dropout(p=0.0) is the identity in the forward pass; nothing to do.
    @pl.when(kh == pl.num_programs(1) - 1)
    def _():
        o_ref[...] = (acc_ref[...] + b2_ref[...]).astype(o_ref.dtype)


def _round_up(v, m):
    return (v + m - 1) // m * m


def _vmem_limit_bytes():
    # Leave ~16 MiB headroom for compiler scratch / double-buffered tiles;
    # cap at 112 MiB so v5e/v6e (128 MiB) also keep headroom.
    try:
        cap = pltpu.get_tpu_info().vmem_capacity_bytes
    except Exception:
        cap = 64 * 1024 * 1024
    return int(max(32 * 1024 * 1024, min(cap - 16 * 1024 * 1024,
                                         112 * 1024 * 1024)))


def mlp_pallas(x, w1, b1, w2, b2, *, tm=None, th=None):
    """x: (B, N, C_in) -> (B, N, C_out);  y = fc2(GELU(fc1(x)))."""
    B, N, C_in = x.shape
    H = w1.shape[1]
    C_out = w2.shape[1]
    M = B * N

    vmem_limit = _vmem_limit_bytes()

    # Token tile: 512 on 128-MiB-VMEM chips (v5e/v6e), 256 on 64-MiB (v7x).
    # Shrink only in multiples of 128 so the MXU rows stay filled.
    if tm is None:
        tm = 512 if vmem_limit >= 96 * 1024 * 1024 else 256
    tm = max(128, min(tm, _round_up(M, 128)))

    # Hidden tile: stream H in chunks of <= 512 lanes (bounds weight residency
    # to 2*th*(C_in+C_out) bytes).  Pad H with zeros so th divides it exactly
    # (zero-padded w2 rows contribute nothing, so this is exact).
    if th is None:
        th = 512
    if H <= th:
        th = _round_up(H, 128)
    Hp = _round_up(H, th)

    x2d = x.reshape(M, C_in)

    # Pre-cast weights to bf16: full-rate MXU and half the VMEM/DMA.
    w1_bf = w1.astype(jnp.bfloat16)
    w2_bf = w2.astype(jnp.bfloat16)
    b1_2d = b1.reshape(1, H).astype(jnp.float32)
    b2_2d = b2.reshape(1, C_out).astype(jnp.float32)
    if Hp != H:
        w1_bf = jnp.pad(w1_bf, ((0, 0), (0, Hp - H)))
        b1_2d = jnp.pad(b1_2d, ((0, 0), (0, Hp - H)))
        w2_bf = jnp.pad(w2_bf, ((0, Hp - H), (0, 0)))

    n_m = (M + tm - 1) // tm
    n_h = Hp // th
    grid = (n_m, n_h)

    itemsize = jnp.dtype(x.dtype).itemsize
    cost = pl.CostEstimate(
        flops=2 * M * (C_in * Hp + Hp * C_out),
        transcendentals=M * Hp,
        bytes_accessed=(M * C_in * itemsize                # x
                        + M * C_out * itemsize             # y
                        + n_m * (C_in * Hp + Hp * C_out) * 2  # bf16 weights / M tile
                        + n_m * Hp * 4 + C_out * 4),       # f32 biases
    )

    out = pl.pallas_call(
        _mlp_kernel,
        out_shape=jax.ShapeDtypeStruct((M, C_out), x.dtype),
        grid_spec=pltpu.PrefetchScalarGridSpec(
            num_scalar_prefetch=0,
            grid=grid,
            in_specs=[
                pl.BlockSpec((tm, C_in), lambda i, k: (i, 0)),   # x tile (reused across k)
                pl.BlockSpec((C_in, th), lambda i, k: (0, k)),   # w1 H-chunk
                pl.BlockSpec((1, th), lambda i, k: (0, k)),      # b1 H-chunk
                pl.BlockSpec((th, C_out), lambda i, k: (k, 0)),  # w2 H-chunk
                pl.BlockSpec((1, C_out), lambda i, k: (0, 0)),   # b2 (tiny, constant)
            ],
            out_specs=pl.BlockSpec((tm, C_out), lambda i, k: (i, 0)),
            scratch_shapes=[pltpu.VMEM((tm, C_out), jnp.float32)],
        ),
        compiler_params=pltpu.CompilerParams(
            dimension_semantics=("parallel", "arbitrary"),  # tokens parallel, H reduction
            vmem_limit_bytes=vmem_limit,
        ),
        cost_estimate=cost,
    )(x2d, w1_bf, b1_2d, w2_bf, b2_2d)

    return out.reshape(B, N, C_out)


def mlp_reference(x, w1, b1, w2, b2):
    h = jnp.einsum("bnc,ch->bnh", x, w1) + b1
    h = 0.5 * h * (1.0 + jax.lax.erf(h / jnp.sqrt(2.0)))
    return jnp.einsum("bnh,ho->bno", h, w2) + b2


if __name__ == "__main__":
    # Small, MLP-shaped problem: batch=2, seq=64 tokens, C_in=128, hidden=256.
    B, N = 2, 64
    C_in, H, C_out = 128, 256, 128

    key = jax.random.PRNGKey(0)
    kx, k1, k2, k3, k4 = jax.random.split(key, 5)

    x = jax.random.normal(kx, (B, N, C_in), dtype=jnp.float32)

    # Deterministic synthetic parameters (PyTorch Linear shapes: fc1 C->H, fc2 H->C_out).
    bound1 = 1.0 / math.sqrt(C_in)
    bound2 = 1.0 / math.sqrt(H)
    w1 = jax.random.uniform(k1, (C_in, H), jnp.float32, -bound1, bound1)
    b1 = jax.random.uniform(k2, (H,), jnp.float32, -bound1, bound1)
    w2 = jax.random.uniform(k3, (H, C_out), jnp.float32, -bound2, bound2)
    b2 = jax.random.uniform(k4, (C_out,), jnp.float32, -bound2, bound2)

    y = mlp_pallas(x, w1, b1, w2, b2)
    y = jax.block_until_ready(y)

    y_ref = mlp_reference(x, w1, b1, w2, b2)
    assert y.shape == (B, N, C_out)
    # bf16 MXU inputs with f32 accumulation: error vs f32 reference is ~1e-3.
    assert jnp.allclose(y, y_ref, atol=2e-2, rtol=2e-2)

    print("KERNEL_OK")
</pallas_src>

<mosaic_0001>
module attributes {stable_mosaic.version = 11 : i64} {
  func.func @_mlp_kernel(%arg0: i32, %arg1: i32, %arg2: memref<128x128xf32, #tpu.memory_space<vmem>>, %arg3: memref<128x256xbf16, #tpu.memory_space<vmem>>, %arg4: memref<1x256xf32, #tpu.memory_space<vmem>>, %arg5: memref<256x128xbf16, #tpu.memory_space<vmem>>, %arg6: memref<1x128xf32, #tpu.memory_space<vmem>>, %arg7: memref<128x128xf32, #tpu.memory_space<vmem>>, %arg8: memref<128x128xf32, #tpu.memory_space<vmem>>) attributes {dimension_semantics = [#tpu.dimension_semantics<parallel>, #tpu.dimension_semantics<arbitrary>], iteration_bounds = array<i64: 1, 1>, scalar_prefetch = 0 : i64, scratch_operands = 1 : i64, tpu.core_type = #tpu.core_type<tc>, window_params = [{transform_indices = @transform_0, window_bounds = array<i64: 128, 128>}, {transform_indices = @transform_1, window_bounds = array<i64: 128, 256>}, {transform_indices = @transform_2, window_bounds = array<i64: 1, 256>}, {transform_indices = @transform_3, window_bounds = array<i64: 256, 128>}, {pipeline_mode = #tpu.pipeline_mode<synchronous>, transform_indices = @transform_4, window_bounds = array<i64: 1, 128>}, {transform_indices = @transform_5, window_bounds = array<i64: 128, 128>}]} {
    %c0_i32 = arith.constant 0 : i32
    %0 = arith.cmpi eq, %arg1, %c0_i32 : i32
    %1 = arith.extui %0 : i1 to i32
    %c0_i32_0 = arith.constant 0 : i32
    %2 = arith.cmpi ne, %1, %c0_i32_0 : i32
    scf.if %2 {
      %cst_18 = arith.constant 0.000000e+00 : f32
      %27 = vector.broadcast %cst_18 : f32 to vector<128x128xf32>
      %c0_19 = arith.constant 0 : index
      %c0_20 = arith.constant 0 : index
      %28 = vector.load %arg8[%c0_19, %c0_20] : memref<128x128xf32, #tpu.memory_space<vmem>>, vector<128x128xf32>
      tpu.vector_store %arg8[%c0_19, %c0_20], %27 {strides = array<i32>} : memref<128x128xf32, #tpu.memory_space<vmem>>, vector<128x128xf32>,
    } else {
    }
    %c0 = arith.constant 0 : index
    %c0_1 = arith.constant 0 : index
    %3 = vector.load %arg2[%c0, %c0_1] : memref<128x128xf32, #tpu.memory_space<vmem>>, vector<128x128xf32>
    %4 = arith.truncf %3 : vector<128x128xf32> to vector<128x128xbf16>
    %c0_2 = arith.constant 0 : index
    %c0_3 = arith.constant 0 : index
    %5 = vector.load %arg3[%c0_2, %c0_3] : memref<128x256xbf16, #tpu.memory_space<vmem>>, vector<128x256xbf16>
    %cst = arith.constant dense<0.000000e+00> : vector<128x256xf32>
    %6 = tpu.matmul %4, %5, %cst {dimension_numbers = #tpu.dot_dimension_numbers<[1], [0], [0], [1], [0, 0, 1, 1], [], []>} : vector<128x128xbf16>, vector<128x256xbf16>, vector<128x256xf32> -> vector<128x256xf32>
    %c0_4 = arith.constant 0 : index
    %c0_5 = arith.constant 0 : index
    %7 = vector.load %arg4[%c0_4, %c0_5] : memref<1x256xf32, #tpu.memory_space<vmem>>, vector<1x256xf32>
    %8 = vector.broadcast %7 : vector<1x256xf32> to vector<128x256xf32>
    %9 = arith.addf %6, %8 : vector<128x256xf32>
    %cst_6 = arith.constant 5.000000e-01 : f32
    %10 = vector.broadcast %cst_6 : f32 to vector<128x256xf32>
    %11 = arith.mulf %10, %9 : vector<128x256xf32>
    %cst_7 = arith.constant 0.707106769 : f32
    %12 = vector.broadcast %cst_7 : f32 to vector<128x256xf32>
    %13 = arith.mulf %9, %12 : vector<128x256xf32>
    %14 = math.erf %13 : vector<128x256xf32>
    %cst_8 = arith.constant 1.000000e+00 : f32
    %15 = vector.broadcast %cst_8 : f32 to vector<128x256xf32>
    %16 = arith.addf %15, %14 : vector<128x256xf32>
    %17 = arith.mulf %11, %16 : vector<128x256xf32>
    %c0_9 = arith.constant 0 : index
    %c0_10 = arith.constant 0 : index
    %18 = vector.load %arg8[%c0_9, %c0_10] : memref<128x128xf32, #tpu.memory_space<vmem>>, vector<128x128xf32>
    %19 = arith.truncf %17 : vector<128x256xf32> to vector<128x256xbf16>
    %c0_11 = arith.constant 0 : index
    %c0_12 = arith.constant 0 : index
    %20 = vector.load %arg5[%c0_11, %c0_12] : memref<256x128xbf16, #tpu.memory_space<vmem>>, vector<256x128xbf16>
    %cst_13 = arith.constant dense<0.000000e+00> : vector<128x128xf32>
    %21 = tpu.matmul %19, %20, %cst_13 {dimension_numbers = #tpu.dot_dimension_numbers<[1], [0], [0], [1], [0, 0, 1, 1], [], []>} : vector<128x256xbf16>, vector<256x128xbf16>, vector<128x128xf32> -> vector<128x128xf32>
    %22 = arith.addf %18, %21 : vector<128x128xf32>
    %c0_14 = arith.constant 0 : index
    %c0_15 = arith.constant 0 : index
    %23 = vector.load %arg8[%c0_14, %c0_15] : memref<128x128xf32, #tpu.memory_space<vmem>>, vector<128x128xf32>
    tpu.vector_store %arg8[%c0_14, %c0_15], %22 {strides = array<i32>} : memref<128x128xf32, #tpu.memory_space<vmem>>, vector<128x128xf32>,
    %c0_i32_16 = arith.constant 0 : i32
    %24 = arith.cmpi eq, %arg1, %c0_i32_16 : i32
    %25 = arith.extui %24 : i1 to i32
    %c0_i32_17 = arith.constant 0 : i32
    %26 = arith.cmpi ne, %25, %c0_i32_17 : i32
    scf.if %26 {
      %c0_18 = arith.constant 0 : index
      %c0_19 = arith.constant 0 : index
      %27 = vector.load %arg8[%c0_18, %c0_19] : memref<128x128xf32, #tpu.memory_space<vmem>>, vector<128x128xf32>
      %c0_20 = arith.constant 0 : index
      %c0_21 = arith.constant 0 : index
      %28 = vector.load %arg6[%c0_20, %c0_21] : memref<1x128xf32, #tpu.memory_space<vmem>>, vector<1x128xf32>
      %29 = vector.broadcast %28 : vector<1x128xf32> to vector<128x128xf32>
      %30 = arith.addf %27, %29 : vector<128x128xf32>
      %c0_22 = arith.constant 0 : index
      %c0_23 = arith.constant 0 : index
      %31 = vector.load %arg7[%c0_22, %c0_23] : memref<128x128xf32, #tpu.memory_space<vmem>>, vector<128x128xf32>
      tpu.vector_store %arg7[%c0_22, %c0_23], %30 {strides = array<i32>} : memref<128x128xf32, #tpu.memory_space<vmem>>, vector<128x128xf32>,
    } else {
    }
    return
  }
  func.func @transform_0(%arg0: i32, %arg1: i32) -> (i32, i32) {
    %c0_i32 = arith.constant 0 : i32
    %c0_i32_0 = arith.constant 0 : i32
    return %arg0, %c0_i32 : i32, i32
  }
  func.func @transform_1(%arg0: i32, %arg1: i32) -> (i32, i32) {
    %c0_i32 = arith.constant 0 : i32
    %c0_i32_0 = arith.constant 0 : i32
    return %c0_i32, %arg1 : i32, i32
  }
  func.func @transform_2(%arg0: i32, %arg1: i32) -> (i32, i32) {
    %c0_i32 = arith.constant 0 : i32
    %c0_i32_0 = arith.constant 0 : i32
    return %c0_i32, %arg1 : i32, i32
  }
  func.func @transform_3(%arg0: i32, %arg1: i32) -> (i32, i32) {
    %c0_i32 = arith.constant 0 : i32
    %c0_i32_0 = arith.constant 0 : i32
    return %arg1, %c0_i32 : i32, i32
  }
  func.func @transform_4(%arg0: i32, %arg1: i32) -> (i32, i32) {
    %c0_i32 = arith.constant 0 : i32
    %c0_i32_0 = arith.constant 0 : i32
    %c0_i32_1 = arith.constant 0 : i32
    return %c0_i32, %c0_i32_0 : i32, i32
  }
  func.func @transform_5(%arg0: i32, %arg1: i32) -> (i32, i32) {
    %c0_i32 = arith.constant 0 : i32
    %c0_i32_0 = arith.constant 0 : i32
    return %arg0, %c0_i32 : i32, i32
  }
}

</mosaic_0001>

<llo_original>
// kernel: tpu_custom_call.1
$region0: #{tpu_custom_call.1}
  #allocation0 [shape = 'u32[]', space=smem, size = 0x4, offset = 0x4, fixed_abs, tag = 'smem constant byte address 0x4 - core index']
  #allocation1 [shape = 'u32[144,128]{1,0:T(1,128)}', space=vmem, size = 0x12000, scoped, tag = 'internal scratch']
  #allocation2 [shape = 'f32[128,128]{1,0:T(8,128)}', space=vmem, size = 0x10000, scoped, tag = 'scratch operand']
  %s0 = inlined_call_operand.hbm [shape: f32[128,128], index: 0, kind: input, shape index: {}]
  %s1 = inlined_call_operand.hbm [shape: bf16[128,256], index: 1, kind: input, shape index: {}]
  %s2 = inlined_call_operand.vmem [shape: f32[1,256], index: 2, kind: input, shape index: {}]
  %s3 = inlined_call_operand.hbm [shape: bf16[256,128], index: 3, kind: input, shape index: {}]
  %s4 = inlined_call_operand.vmem [shape: f32[1,128], index: 4, kind: input, shape index: {}]
  %s5 = inlined_call_operand.hbm [shape: f32[128,128], index: 5, kind: output, shape index: {}]
  %s6 = sld [smem:[#allocation0]]
  $region50: #{tpu_custom_call.1} parent=0
    _
  %s8 = ssub.s32 1, %s6
  %s9 = scalar_select 0, %s8, %s6
  $region1: #{tpu_custom_call.1} parent=0
    #allocation3 [shape = 'u8[65536]{0}', space=vmem, size = 0x10000, scoped, tag = 'input window, operand 0, single buffered']
    #allocation4 [shape = 's32[1]{0}', space=sflag, size = 0x4, scoped, tag = 'scoped memory for tpu_custom_call.1']
    #allocation5 [shape = 's32[1]{0}', space=sflag, size = 0x4, scoped, tag = 'scoped memory for tpu_custom_call.1']
    #allocation6 [shape = 'u8[65536]{0}', space=vmem, size = 0x10000, scoped, tag = 'input window, operand 1, single buffered']
    #allocation7 [shape = 's32[1]{0}', space=sflag, size = 0x4, scoped, tag = 'scoped memory for tpu_custom_call.1']
    #allocation8 [shape = 'u8[65536]{0}', space=vmem, size = 0x10000, scoped, tag = 'input window, operand 3, single buffered']
    #allocation9 [shape = 'u8[65536]{0}', space=vmem, size = 0x10000, scoped, tag = 'output window, operand 0, single buffered']
    %10 = vsyncpa [#allocation4], 0
    %11 = vsyncpa [#allocation7], 0
    %12 = vsyncpa [#allocation5], 0
    // Predicated region
    $region2: #{tpu_custom_call.1} parent=1 // pred_check
      _
    $region3: #{tpu_custom_call.1} parent=1 // pred_check_branch
      %14 = sbr.rel (0) target = $region5
    $region4: #{tpu_custom_call.1} parent=1 // pred_region
      %s16 = ssub.s32 2048, 2048
      %17 = vsyncadd [#allocation4], %s16
      %s18 = sshll.u32 [#allocation3], 4
      %s19 = int_to_ptr.vmem [resolvable:$true] %s18
      %24 = dma.hbm_to_vmem [thread:$0]  %s0, 2048, %s19, [#allocation4], 128, 128, 8
    $region5: #{tpu_custom_call.1} parent=1 // pred_fallthru
      _
    // Predicated region
    $region6: #{tpu_custom_call.1} parent=1 // pred_check
      _
    $region7: #{tpu_custom_call.1} parent=1 // pred_check_branch
      %26 = sbr.rel (0) target = $region9
    $region8: #{tpu_custom_call.1} parent=1 // pred_region
      %s28 = ssub.s32 2048, 2048
      %29 = vsyncadd [#allocation7], %s28
      %s30 = sshll.u32 [#allocation6], 4
      %s31 = int_to_ptr.vmem [resolvable:$true] %s30
      %36 = dma.hbm_to_vmem [thread:$0]  %s1, 2048, %s31, [#allocation7], 128, 128, 8
    $region9: #{tpu_custom_call.1} parent=1 // pred_fallthru
      _
    // Predicated region
    $region10: #{tpu_custom_call.1} parent=1 // pred_check
      _
    $region11: #{tpu_custom_call.1} parent=1 // pred_check_branch
      %38 = sbr.rel (0) target = $region13
    $region12: #{tpu_custom_call.1} parent=1 // pred_region
      _
    $region13: #{tpu_custom_call.1} parent=1 // pred_fallthru
      _
    // Predicated region
    $region14: #{tpu_custom_call.1} parent=1 // pred_check
      _
    $region15: #{tpu_custom_call.1} parent=1 // pred_check_branch
      %40 = sbr.rel (0) target = $region17
    $region16: #{tpu_custom_call.1} parent=1 // pred_region
      %s42 = ssub.s32 2048, 2048
      %43 = vsyncadd [#allocation7], %s42
      %s44 = sshll.u32 [#allocation8], 4
      %s45 = int_to_ptr.vmem [resolvable:$true] %s44
      %50 = dma.hbm_to_vmem [thread:$0]  %s3, 2048, %s45, [#allocation7], 64, 64, 4
    $region17: #{tpu_custom_call.1} parent=1 // pred_fallthru
      _
    // Predicated region
    $region18: #{tpu_custom_call.1} parent=1 // pred_check
      _
    $region19: #{tpu_custom_call.1} parent=1 // pred_check_branch
      %52 = sbr.rel (0) target = $region21
    $region20: #{tpu_custom_call.1} parent=1 // pred_region
      _
    $region21: #{tpu_custom_call.1} parent=1 // pred_fallthru
      _
    // Predicated region
    $region22: #{tpu_custom_call.1} parent=1 // pred_check
      _
    $region23: #{tpu_custom_call.1} parent=1 // pred_check_branch
      %54 = sbr.rel (0) target = $region25
    $region24: #{tpu_custom_call.1} parent=1 // pred_region
      %55 = dma.done [#allocation4], 2048
    $region25: #{tpu_custom_call.1} parent=1 // pred_fallthru
      _
    // Predicated region
    $region26: #{tpu_custom_call.1} parent=1 // pred_check
      _
    $region27: #{tpu_custom_call.1} parent=1 // pred_check_branch
      %57 = sbr.rel (0) target = $region29
    $region28: #{tpu_custom_call.1} parent=1 // pred_region
      %58 = dma.done [#allocation7], 2048
    $region29: #{tpu_custom_call.1} parent=1 // pred_fallthru
      _
    // Predicated region
    $region30: #{tpu_custom_call.1} parent=1 // pred_check
      _
    $region31: #{tpu_custom_call.1} parent=1 // pred_check_branch
      %60 = sbr.rel (0) target = $region33
    $region32: #{tpu_custom_call.1} parent=1 // pred_region
      %61 = dma.done [#allocation7], 2048
    $region33: #{tpu_custom_call.1} parent=1 // pred_fallthru
      _
    %p63 = scmp.eq.s32.totalorder 0, 0
    // Predicated region
    $region34: #{tpu_custom_call.1} parent=1 // pred_check
      %p64 = pneg %p63
    $region35: #{tpu_custom_call.1} parent=1 // pred_check_branch
      %66 = sbr.rel (%p64) target = $region37
    $region36: #{tpu_custom_call.1} parent=1 // pred_region
      %67 = vst [vmem:[#allocation2] sm:$0xff] 0.0
      %68 = vst [vmem:[#allocation2 + $0x8] sm:$0xff] 0.0
      %69 = vst [vmem:[#allocation2 + $0x10] sm:$0xff] 0.0
      %70 = vst [vmem:[#allocation2 + $0x18] sm:$0xff] 0.0
      %71 = vst [vmem:[#allocation2 + $0x20] sm:$0xff] 0.0
      %72 = vst [vmem:[#allocation2 + $0x28] sm:$0xff] 0.0
      %73 = vst [vmem:[#allocation2 + $0x30] sm:$0xff] 0.0
      %74 = vst [vmem:[#allocation2 + $0x38] sm:$0xff] 0.0
      %75 = vst [vmem:[#allocation2 + $0x40] sm:$0xff] 0.0
      %76 = vst [vmem:[#allocation2 + $0x48] sm:$0xff] 0.0
      %77 = vst [vmem:[#allocation2 + $0x50] sm:$0xff] 0.0
      %78 = vst [vmem:[#allocation2 + $0x58] sm:$0xff] 0.0
      %79 = vst [vmem:[#allocation2 + $0x60] sm:$0xff] 0.0
      %80 = vst [vmem:[#allocation2 + $0x68] sm:$0xff] 0.0
      %81 = vst [vmem:[#allocation2 + $0x70] sm:$0xff] 0.0
      %82 = vst [vmem:[#allocation2 + $0x78] sm:$0xff] 0.0
    $region37: #{tpu_custom_call.1} parent=1 // pred_fallthru
      _
    %v83 = vld [vmem:[#allocation3] sm:$0xff]
    %v84 = vld [vmem:[#allocation3 + $0x8] sm:$0xff]
    %v85 = vld [vmem:[#allocation3 + $0x10] sm:$0xff]
    %v86 = vld [vmem:[#allocation3 + $0x18] sm:$0xff]
    %v87 = vld [vmem:[#allocation3 + $0x20] sm:$0xff]
    %v88 = vld [vmem:[#allocation3 + $0x28] sm:$0xff]
    %v89 = vld [vmem:[#allocation3 + $0x30] sm:$0xff]
    %v90 = vld [vmem:[#allocation3 + $0x38] sm:$0xff]
    %v91 = vld [vmem:[#allocation3 + $0x40] sm:$0xff]
    %v92 = vld [vmem:[#allocation3 + $0x48] sm:$0xff]
    %v93 = vld [vmem:[#allocation3 + $0x50] sm:$0xff]
    %v94 = vld [vmem:[#allocation3 + $0x58] sm:$0xff]
    %v95 = vld [vmem:[#allocation3 + $0x60] sm:$0xff]
    %v96 = vld [vmem:[#allocation3 + $0x68] sm:$0xff]
    %v97 = vld [vmem:[#allocation3 + $0x70] sm:$0xff]
    %v98 = vld [vmem:[#allocation3 + $0x78] sm:$0xff]
    %v99 = vpack.c.bf16 %v84, %v83
    %v100 = vpack.c.bf16 %v86, %v85
    %v101 = vpack.c.bf16 %v88, %v87
    %v102 = vpack.c.bf16 %v90, %v89
    %v103 = vpack.c.bf16 %v92, %v91
    %v104 = vpack.c.bf16 %v94, %v93
    %v105 = vpack.c.bf16 %v96, %v95
    %v106 = vpack.c.bf16 %v98, %v97
    %v107 = vld [vmem:[#allocation6] sm:$0xff]
    %v108 = vld [vmem:[#allocation6 + $0x8] sm:$0xff]
    %v109 = vld [vmem:[#allocation6 + $0x10] sm:$0xff]
    %v110 = vld [vmem:[#allocation6 + $0x18] sm:$0xff]
    %v111 = vld [vmem:[#allocation6 + $0x20] sm:$0xff]
    %v112 = vld [vmem:[#allocation6 + $0x28] sm:$0xff]
    %v113 = vld [vmem:[#allocation6 + $0x30] sm:$0xff]
    %v114 = vld [vmem:[#allocation6 + $0x38] sm:$0xff]
    %v115 = vld [vmem:[#allocation6 + $0x40] sm:$0xff]
    %v116 = vld [vmem:[#allocation6 + $0x48] sm:$0xff]
    %v117 = vld [vmem:[#allocation6 + $0x50] sm:$0xff]
    %v118 = vld [vmem:[#allocation6 + $0x58] sm:$0xff]
    %v119 = vld [vmem:[#allocation6 + $0x60] sm:$0xff]
    %v120 = vld [vmem:[#allocation6 + $0x68] sm:$0xff]
    %v121 = vld [vmem:[#allocation6 + $0x70] sm:$0xff]
    %v122 = vld [vmem:[#allocation6 + $0x78] sm:$0xff]
    %v123 = vld [vmem:[%s2] sm:$0x3]
    %v125 = vlaneseq
    %v126 = vshrl.u32 %v125, 7
    %v127 = vsub.s32 0, %v126
    %v128 = vrot.slane %v123, %v127
    %v129 = vlaneseq
    %v130 = vshrl.u32 %v129, 7
    %v131 = vsub.s32 1, %v130
    %v132 = vrot.slane %v123, %v131
    %v151 = vunpack.c.l.b16 %v107
    %v152 = vunpack.c.h.b16 %v107
    %v153 = vunpack.c.l.b16 %v108
    %v154 = vunpack.c.h.b16 %v108
    %v155 = vunpack.c.l.b16 %v109
    %v156 = vunpack.c.h.b16 %v109
    %v157 = vunpack.c.l.b16 %v110
    %v158 = vunpack.c.h.b16 %v110
    %v159 = vunpack.c.l.b16 %v111
    %v160 = vunpack.c.h.b16 %v111
    %v161 = vunpack.c.l.b16 %v112
    %v162 = vunpack.c.h.b16 %v112
    %v163 = vunpack.c.l.b16 %v113
    %v164 = vunpack.c.h.b16 %v113
    %v165 = vunpack.c.l.b16 %v114
    %v166 = vunpack.c.h.b16 %v114
    %v167 = vunpack.c.l.b16 %v115
    %v168 = vunpack.c.h.b16 %v115
    %v169 = vunpack.c.l.b16 %v116
    %v170 = vunpack.c.h.b16 %v116
    %v171 = vunpack.c.l.b16 %v117
    %v172 = vunpack.c.h.b16 %v117
    %v173 = vunpack.c.l.b16 %v118
    %v174 = vunpack.c.h.b16 %v118
    %v175 = vunpack.c.l.b16 %v119
    %v176 = vunpack.c.h.b16 %v119
    %v177 = vunpack.c.l.b16 %v120
    %v178 = vunpack.c.h.b16 %v120
    %v179 = vunpack.c.l.b16 %v121
    %v180 = vunpack.c.h.b16 %v121
    %v181 = vunpack.c.l.b16 %v122
    %v182 = vunpack.c.h.b16 %v122
    %v183 = vpack.c.b16 %v153, %v151
    %v184 = vpack.c.b16 %v154, %v152
    %v185 = vpack.c.b16 %v157, %v155
    %v186 = vpack.c.b16 %v158, %v156
    %v187 = vpack.c.b16 %v161, %v159
    %v188 = vpack.c.b16 %v162, %v160
    %v189 = vpack.c.b16 %v165, %v163
    %v190 = vpack.c.b16 %v166, %v164
    %v191 = vpack.c.b16 %v169, %v167
    %v192 = vpack.c.b16 %v170, %v168
    %v193 = vpack.c.b16 %v173, %v171
    %v194 = vpack.c.b16 %v174, %v172
    %v195 = vpack.c.b16 %v177, %v175
    %v196 = vpack.c.b16 %v178, %v176
    %v197 = vpack.c.b16 %v181, %v179
    %v198 = vpack.c.b16 %v182, %v180
    %215 = vmatprep.subr.bf16.mxu0 %v184
    %216 = vmatpush1.bf16.msra.mxu0 %v183
    %217 = vmatprep.subr.bf16.mxu0 %v186
    %218 = vmatpush1.bf16.msra.mxu0 %v185
    %219 = vmatprep.subr.bf16.mxu0 %v188
    %220 = vmatpush1.bf16.msra.mxu0 %v187
    %221 = vmatprep.subr.bf16.mxu0 %v190
    %222 = vmatpush1.bf16.msra.mxu0 %v189
    %223 = vmatprep.subr.bf16.mxu0 %v192
    %224 = vmatpush1.bf16.msra.mxu0 %v191
    %225 = vmatprep.subr.bf16.mxu0 %v194
    %226 = vmatpush1.bf16.msra.mxu0 %v193
    %227 = vmatprep.subr.bf16.mxu0 %v196
    %228 = vmatpush1.bf16.msra.mxu0 %v195
    %229 = vmatprep.subr.bf16.mxu0 %v198
    %230 = vmatpush1.bf16.msra.mxu0 %v197
    %231 = vmatprep.subr.bf16.mxu0 0
    %232 = vmatpush1.bf16.msra.mxu0 0
    %233 = vmatprep.subr.bf16.mxu0 0
    %234 = vmatpush1.bf16.msra.mxu0 0
    %235 = vmatprep.subr.bf16.mxu0 0
    %236 = vmatpush1.bf16.msra.mxu0 0
    %237 = vmatprep.subr.bf16.mxu0 0
    %238 = vmatpush1.bf16.msra.mxu0 0
    %239 = vmatprep.subr.bf16.mxu0 0
    %240 = vmatpush1.bf16.msra.mxu0 0
    %241 = vmatprep.subr.bf16.mxu0 0
    %242 = vmatpush1.bf16.msra.mxu0 0
    %243 = vmatprep.subr.bf16.mxu0 0
    %244 = vmatpush1.bf16.msra.mxu0 0
    %245 = vmatprep.subr.bf16.mxu0 0
    %246 = vmatpush1.bf16.msra.mxu0 0
    %247 = vmatprep.mubr.bf16.mxu0 0
    %248 = vmatmul.mubr.bf16.gmra.mrb[0].mxu0 %v99
    %v249 = vpop.f32.mrb[0].mxu0
    %v250 = vadd.f32 %v128, %v249
    %v251 = vpop.f32.mrb[0].mxu0
    %v252 = vadd.f32 %v132, %v251
    %v253 = vpop.f32.mrb[0].mxu0
    %v254 = vadd.f32 %v128, %v253
    %v255 = vpop.f32.mrb[0].mxu0
    %v256 = vadd.f32 %v132, %v255
    %257 = vmatprep.mubr.bf16.mxu0 0
    %258 = vmatmul.mubr.bf16.gmra.mrb[0].mxu0 %v100
    %v259 = vpop.f32.mrb[0].mxu0
    %v260 = vadd.f32 %v128, %v259
    %v261 = vpop.f32.mrb[0].mxu0
    %v262 = vadd.f32 %v132, %v261
    %v263 = vpop.f32.mrb[0].mxu0
    %v264 = vadd.f32 %v128, %v263
    %v265 = vpop.f32.mrb[0].mxu0
    %v266 = vadd.f32 %v132, %v265
    %267 = vmatprep.mubr.bf16.mxu0 0
    %268 = vmatmul.mubr.bf16.gmra.mrb[0].mxu0 %v101
    %v269 = vpop.f32.mrb[0].mxu0
    %v270 = vadd.f32 %v128, %v269
    %v271 = vpop.f32.mrb[0].mxu0
    %v272 = vadd.f32 %v132, %v271
    %v273 = vpop.f32.mrb[0].mxu0
    %v274 = vadd.f32 %v128, %v273
    %v275 = vpop.f32.mrb[0].mxu0
    %v276 = vadd.f32 %v132, %v275
    %277 = vmatprep.mubr.bf16.mxu0 0
    %278 = vmatmul.mubr.bf16.gmra.mrb[0].mxu0 %v102
    %v279 = vpop.f32.mrb[0].mxu0
    %v280 = vadd.f32 %v128, %v279
    %v281 = vpop.f32.mrb[0].mxu0
    %v282 = vadd.f32 %v132, %v281
    %v283 = vpop.f32.mrb[0].mxu0
    %v284 = vadd.f32 %v128, %v283
    %v285 = vpop.f32.mrb[0].mxu0
    %v286 = vadd.f32 %v132, %v285
    %287 = vmatprep.mubr.bf16.mxu0 0
    %288 = vmatmul.mubr.bf16.gmra.mrb[0].mxu0 %v103
    %v289 = vpop.f32.mrb[0].mxu0
    %v290 = vadd.f32 %v128, %v289
    %v291 = vpop.f32.mrb[0].mxu0
    %v292 = vadd.f32 %v132, %v291
    %v293 = vpop.f32.mrb[0].mxu0
    %v294 = vadd.f32 %v128, %v293
    %v295 = vpop.f32.mrb[0].mxu0
    %v296 = vadd.f32 %v132, %v295
    %297 = vmatprep.mubr.bf16.mxu0 0
    %298 = vmatmul.mubr.bf16.gmra.mrb[0].mxu0 %v104
    %v299 = vpop.f32.mrb[0].mxu0
    %v300 = vadd.f32 %v128, %v299
    %v301 = vpop.f32.mrb[0].mxu0
    %v302 = vadd.f32 %v132, %v301
    %v303 = vpop.f32.mrb[0].mxu0
    %v304 = vadd.f32 %v128, %v303
    %v305 = vpop.f32.mrb[0].mxu0
    %v306 = vadd.f32 %v132, %v305
    %307 = vmatprep.mubr.bf16.mxu0 0
    %308 = vmatmul.mubr.bf16.gmra.mrb[0].mxu0 %v105
    %v309 = vpop.f32.mrb[0].mxu0
    %v310 = vadd.f32 %v128, %v309
    %v311 = vpop.f32.mrb[0].mxu0
    %v312 = vadd.f32 %v132, %v311
    %v313 = vpop.f32.mrb[0].mxu0
    %v314 = vadd.f32 %v128, %v313
    %v315 = vpop.f32.mrb[0].mxu0
    %v316 = vadd.f32 %v132, %v315
    %317 = vmatprep.mubr.bf16.mxu0 0
    %318 = vmatmul.mubr.bf16.gmra.mrb[0].mxu0 %v106
    %v319 = vpop.f32.mrb[0].mxu0
    %v320 = vadd.f32 %v128, %v319
    %v321 = vpop.f32.mrb[0].mxu0
    %v322 = vadd.f32 %v132, %v321
    %v323 = vpop.f32.mrb[0].mxu0
    %v324 = vadd.f32 %v128, %v323
    %v325 = vpop.f32.mrb[0].mxu0
    %v326 = vadd.f32 %v132, %v325
    %327 = vdwg.mxu0
    %v328 = vmul.f32 %v250, 0.5
    %v329 = vmul.f32 %v252, 0.5
    %v330 = vmul.f32 %v254, 0.5
    %v331 = vmul.f32 %v256, 0.5
    %v332 = vmul.f32 %v260, 0.5
    %v333 = vmul.f32 %v262, 0.5
    %v334 = vmul.f32 %v264, 0.5
    %v335 = vmul.f32 %v266, 0.5
    %v336 = vmul.f32 %v270, 0.5
    %v337 = vmul.f32 %v272, 0.5
    %v338 = vmul.f32 %v274, 0.5
    %v339 = vmul.f32 %v276, 0.5
    %v340 = vmul.f32 %v280, 0.5
    %v341 = vmul.f32 %v282, 0.5
    %v342 = vmul.f32 %v284, 0.5
    %v343 = vmul.f32 %v286, 0.5
    %v344 = vmul.f32 %v290, 0.5
    %v345 = vmul.f32 %v292, 0.5
    %v346 = vmul.f32 %v294, 0.5
    %v347 = vmul.f32 %v296, 0.5
    %v348 = vmul.f32 %v300, 0.5
    %v349 = vmul.f32 %v302, 0.5
    %v350 = vmul.f32 %v304, 0.5
    %v351 = vmul.f32 %v306, 0.5
    %v352 = vmul.f32 %v310, 0.5
    %v353 = vmul.f32 %v312, 0.5
    %v354 = vmul.f32 %v314, 0.5
    %v355 = vmul.f32 %v316, 0.5
    %v356 = vmul.f32 %v320, 0.5
    %v357 = vmul.f32 %v322, 0.5
    %v358 = vmul.f32 %v324, 0.5
    %v359 = vmul.f32 %v326, 0.5
    %v360 = vmul.f32 %v250, 0.70710677
    %v361 = vmul.f32 %v252, 0.70710677
    %v362 = vmul.f32 %v254, 0.70710677
    %v363 = vmul.f32 %v256, 0.70710677
    %v364 = vmul.f32 %v260, 0.70710677
    %v365 = vmul.f32 %v262, 0.70710677
    %v366 = vmul.f32 %v264, 0.70710677
    %v367 = vmul.f32 %v266, 0.70710677
    %v368 = vmul.f32 %v270, 0.70710677
    %v369 = vmul.f32 %v272, 0.70710677
    %v370 = vmul.f32 %v274, 0.70710677
    %v371 = vmul.f32 %v276, 0.70710677
    %v372 = vmul.f32 %v280, 0.70710677
    %v373 = vmul.f32 %v282, 0.70710677
    %v374 = vmul.f32 %v284, 0.70710677
    %v375 = vmul.f32 %v286, 0.70710677
    %v376 = vmul.f32 %v290, 0.70710677
    %v377 = vmul.f32 %v292, 0.70710677
    %v378 = vmul.f32 %v294, 0.70710677
    %v379 = vmul.f32 %v296, 0.70710677
    %v380 = vmul.f32 %v300, 0.70710677
    %v381 = vmul.f32 %v302, 0.70710677
    %v382 = vmul.f32 %v304, 0.70710677
    %v383 = vmul.f32 %v306, 0.70710677
    %v384 = vmul.f32 %v310, 0.70710677
    %v385 = vmul.f32 %v312, 0.70710677
    %v386 = vmul.f32 %v314, 0.70710677
    %v387 = vmul.f32 %v316, 0.70710677
    %v388 = vmul.f32 %v320, 0.70710677
    %v389 = vmul.f32 %v322, 0.70710677
    %v390 = vmul.f32 %v324, 0.70710677
    %v391 = vmul.f32 %v326, 0.70710677
    %v392 = verf.f32.pop %v360
    %v393 = verf.f32.pop %v361
    %v394 = verf.f32.pop %v362
    %v395 = verf.f32.pop %v363
    %v396 = verf.f32.pop %v364
    %v397 = verf.f32.pop %v365
    %v398 = verf.f32.pop %v366
    %v399 = verf.f32.pop %v367
    %v400 = verf.f32.pop %v368
    %v401 = verf.f32.pop %v369
    %v402 = verf.f32.pop %v370
    %v403 = verf.f32.pop %v371
    %v404 = verf.f32.pop %v372
    %v405 = verf.f32.pop %v373
    %v406 = verf.f32.pop %v374
    %v407 = verf.f32.pop %v375
    %v408 = verf.f32.pop %v376
    %v409 = verf.f32.pop %v377
    %v410 = verf.f32.pop %v378
    %v411 = verf.f32.pop %v379
    %v412 = verf.f32.pop %v380
    %v413 = verf.f32.pop %v381
    %v414 = verf.f32.pop %v382
    %v415 = verf.f32.pop %v383
    %v416 = verf.f32.pop %v384
    %v417 = verf.f32.pop %v385
    %v418 = verf.f32.pop %v386
    %v419 = verf.f32.pop %v387
    %v420 = verf.f32.pop %v388
    %v421 = verf.f32.pop %v389
    %v422 = verf.f32.pop %v390
    %v423 = verf.f32.pop %v391
    %v424 = vadd.f32 %v392, 1.0
    %v425 = vadd.f32 %v393, 1.0
    %v426 = vadd.f32 %v394, 1.0
    %v427 = vadd.f32 %v395, 1.0
    %v428 = vadd.f32 %v396, 1.0
    %v429 = vadd.f32 %v397, 1.0
    %v430 = vadd.f32 %v398, 1.0
    %v431 = vadd.f32 %v399, 1.0
    %v432 = vadd.f32 %v400, 1.0
    %v433 = vadd.f32 %v401, 1.0
    %v434 = vadd.f32 %v402, 1.0
    %v435 = vadd.f32 %v403, 1.0
    %v436 = vadd.f32 %v404, 1.0
    %v437 = vadd.f32 %v405, 1.0
    %v438 = vadd.f32 %v406, 1.0
    %v439 = vadd.f32 %v407, 1.0
    %v440 = vadd.f32 %v408, 1.0
    %v441 = vadd.f32 %v409, 1.0
    %v442 = vadd.f32 %v410, 1.0
    %v443 = vadd.f32 %v411, 1.0
    %v444 = vadd.f32 %v412, 1.0
    %v445 = vadd.f32 %v413, 1.0
    %v446 = vadd.f32 %v414, 1.0
    %v447 = vadd.f32 %v415, 1.0
    %v448 = vadd.f32 %v416, 1.0
    %v449 = vadd.f32 %v417, 1.0
    %v450 = vadd.f32 %v418, 1.0
    %v451 = vadd.f32 %v419, 1.0
    %v452 = vadd.f32 %v420, 1.0
    %v453 = vadd.f32 %v421, 1.0
    %v454 = vadd.f32 %v422, 1.0
    %v455 = vadd.f32 %v423, 1.0
    %v456 = vmul.f32 %v328, %v424
    %v457 = vmul.f32 %v329, %v425
    %v458 = vmul.f32 %v330, %v426
    %v459 = vmul.f32 %v331, %v427
    %v460 = vmul.f32 %v332, %v428
    %v461 = vmul.f32 %v333, %v429
    %v462 = vmul.f32 %v334, %v430
    %v463 = vmul.f32 %v335, %v431
    %v464 = vmul.f32 %v336, %v432
    %v465 = vmul.f32 %v337, %v433
    %v466 = vmul.f32 %v338, %v434
    %v467 = vmul.f32 %v339, %v435
    %v468 = vmul.f32 %v340, %v436
    %v469 = vmul.f32 %v341, %v437
    %v470 = vmul.f32 %v342, %v438
    %v471 = vmul.f32 %v343, %v439
    %v472 = vmul.f32 %v344, %v440
    %v473 = vmul.f32 %v345, %v441
    %v474 = vmul.f32 %v346, %v442
    %v475 = vmul.f32 %v347, %v443
    %v476 = vmul.f32 %v348, %v444
    %v477 = vmul.f32 %v349, %v445
    %v478 = vmul.f32 %v350, %v446
    %v479 = vmul.f32 %v351, %v447
    %v480 = vmul.f32 %v352, %v448
    %v481 = vmul.f32 %v353, %v449
    %v482 = vmul.f32 %v354, %v450
    %v483 = vmul.f32 %v355, %v451
    %v484 = vmul.f32 %v356, %v452
    %v485 = vmul.f32 %v357, %v453
    %v486 = vmul.f32 %v358, %v454
    %v487 = vmul.f32 %v359, %v455
    %v488 = vld [vmem:[#allocation2] sm:$0xff]
    %v489 = vld [vmem:[#allocation2 + $0x8] sm:$0xff]
    %v490 = vld [vmem:[#allocation2 + $0x10] sm:$0xff]
    %v491 = vld [vmem:[#allocation2 + $0x18] sm:$0xff]
    %v492 = vld [vmem:[#allocation2 + $0x20] sm:$0xff]
    %v493 = vld [vmem:[#allocation2 + $0x28] sm:$0xff]
    %v494 = vld [vmem:[#allocation2 + $0x30] sm:$0xff]
    %v495 = vld [vmem:[#allocation2 + $0x38] sm:$0xff]
    %v496 = vld [vmem:[#allocation2 + $0x40] sm:$0xff]
    %v497 = vld [vmem:[#allocation2 + $0x48] sm:$0xff]
    %v498 = vld [vmem:[#allocation2 + $0x50] sm:$0xff]
    %v499 = vld [vmem:[#allocation2 + $0x58] sm:$0xff]
    %v500 = vld [vmem:[#allocation2 + $0x60] sm:$0xff]
    %v501 = vld [vmem:[#allocation2 + $0x68] sm:$0xff]
    %v502 = vld [vmem:[#allocation2 + $0x70] sm:$0xff]
    %v503 = vld [vmem:[#allocation2 + $0x78] sm:$0xff]
    %v504 = vpack.c.bf16 %v458, %v456
    %v505 = vpack.c.bf16 %v459, %v457
    %v506 = vpack.c.bf16 %v462, %v460
    %v507 = vpack.c.bf16 %v463, %v461
    %v508 = vpack.c.bf16 %v466, %v464
    %v509 = vpack.c.bf16 %v467, %v465
    %v510 = vpack.c.bf16 %v470, %v468
    %v511 = vpack.c.bf16 %v471, %v469
    %v512 = vpack.c.bf16 %v474, %v472
    %v513 = vpack.c.bf16 %v475, %v473
    %v514 = vpack.c.bf16 %v478, %v476
    %v515 = vpack.c.bf16 %v479, %v477
    %v516 = vpack.c.bf16 %v482, %v480
    %v517 = vpack.c.bf16 %v483, %v481
    %v518 = vpack.c.bf16 %v486, %v484
    %v519 = vpack.c.bf16 %v487, %v485
    %v520 = vld [vmem:[#allocation8] sm:$0xf]
    %v521 = vld [vmem:[#allocation8 + $0x4] sm:$0xf]
    %v522 = vld [vmem:[#allocation8 + $0x8] sm:$0xf]
    %v523 = vld [vmem:[#allocation8 + $0xc] sm:$0xf]
    %v524 = vld [vmem:[#allocation8 + $0x10] sm:$0xf]
    %v525 = vld [vmem:[#allocation8 + $0x14] sm:$0xf]
    %v526 = vld [vmem:[#allocation8 + $0x18] sm:$0xf]
    %v527 = vld [vmem:[#allocation8 + $0x1c] sm:$0xf]
    %v528 = vld [vmem:[#allocation8 + $0x20] sm:$0xf]
    %v529 = vld [vmem:[#allocation8 + $0x24] sm:$0xf]
    %v530 = vld [vmem:[#allocation8 + $0x28] sm:$0xf]
    %v531 = vld [vmem:[#allocation8 + $0x2c] sm:$0xf]
    %v532 = vld [vmem:[#allocation8 + $0x30] sm:$0xf]
    %v533 = vld [vmem:[#allocation8 + $0x34] sm:$0xf]
    %v534 = vld [vmem:[#allocation8 + $0x38] sm:$0xf]
    %v535 = vld [vmem:[#allocation8 + $0x3c] sm:$0xf]
    %v536 = vld [vmem:[#allocation8 + $0x40] sm:$0xf]
    %v537 = vld [vmem:[#allocation8 + $0x44] sm:$0xf]
    %v538 = vld [vmem:[#allocation8 + $0x48] sm:$0xf]
    %v539 = vld [vmem:[#allocation8 + $0x4c] sm:$0xf]
    %v540 = vld [vmem:[#allocation8 + $0x50] sm:$0xf]
    %v541 = vld [vmem:[#allocation8 + $0x54] sm:$0xf]
    %v542 = vld [vmem:[#allocation8 + $0x58] sm:$0xf]
    %v543 = vld [vmem:[#allocation8 + $0x5c] sm:$0xf]
    %v544 = vld [vmem:[#allocation8 + $0x60] sm:$0xf]
    %v545 = vld [vmem:[#allocation8 + $0x64] sm:$0xf]
    %v546 = vld [vmem:[#allocation8 + $0x68] sm:$0xf]
    %v547 = vld [vmem:[#allocation8 + $0x6c] sm:$0xf]
    %v548 = vld [vmem:[#allocation8 + $0x70] sm:$0xf]
    %v549 = vld [vmem:[#allocation8 + $0x74] sm:$0xf]
    %v550 = vld [vmem:[#allocation8 + $0x78] sm:$0xf]
    %v551 = vld [vmem:[#allocation8 + $0x7c] sm:$0xf]
    %v584 = vunpack.c.l.b16 %v520
    %v585 = vunpack.c.l.b16 %v521
    %v586 = vunpack.c.l.b16 %v522
    %v587 = vunpack.c.l.b16 %v523
    %v588 = vunpack.c.l.b16 %v524
    %v589 = vunpack.c.l.b16 %v525
    %v590 = vunpack.c.l.b16 %v526
    %v591 = vunpack.c.l.b16 %v527
    %v592 = vunpack.c.l.b16 %v528
    %v593 = vunpack.c.l.b16 %v529
    %v594 = vunpack.c.l.b16 %v530
    %v595 = vunpack.c.l.b16 %v531
    %v596 = vunpack.c.l.b16 %v532
    %v597 = vunpack.c.l.b16 %v533
    %v598 = vunpack.c.l.b16 %v534
    %v599 = vunpack.c.l.b16 %v535
    %v600 = vunpack.c.l.b16 %v536
    %v601 = vunpack.c.l.b16 %v537
    %v602 = vunpack.c.l.b16 %v538
    %v603 = vunpack.c.l.b16 %v539
    %v604 = vunpack.c.l.b16 %v540
    %v605 = vunpack.c.l.b16 %v541
    %v606 = vunpack.c.l.b16 %v542
    %v607 = vunpack.c.l.b16 %v543
    %v608 = vunpack.c.l.b16 %v544
    %v609 = vunpack.c.l.b16 %v545
    %v610 = vunpack.c.l.b16 %v546
    %v611 = vunpack.c.l.b16 %v547
    %v612 = vunpack.c.l.b16 %v548
    %v613 = vunpack.c.l.b16 %v549
    %v614 = vunpack.c.l.b16 %v550
    %v615 = vunpack.c.l.b16 %v551
    %v616 = vpack.c.b16 %v585, %v584
    %v617 = vpack.c.b16 %v587, %v586
    %v618 = vpack.c.b16 %v589, %v588
    %v619 = vpack.c.b16 %v591, %v590
    %v620 = vpack.c.b16 %v593, %v592
    %v621 = vpack.c.b16 %v595, %v594
    %v622 = vpack.c.b16 %v597, %v596
    %v623 = vpack.c.b16 %v599, %v598
    %v624 = vpack.c.b16 %v601, %v600
    %v625 = vpack.c.b16 %v603, %v602
    %v626 = vpack.c.b16 %v605, %v604
    %v627 = vpack.c.b16 %v607, %v606
    %v628 = vpack.c.b16 %v609, %v608
    %v629 = vpack.c.b16 %v611, %v610
    %v630 = vpack.c.b16 %v613, %v612
    %v631 = vpack.c.b16 %v615, %v614
    %648 = vmatprep.subr.bf16.mxu0 0
    %649 = vmatpush1.bf16.msra.mxu0 %v616
    %650 = vmatprep.subr.bf16.mxu0 0
    %651 = vmatpush1.bf16.msra.mxu0 %v617
    %652 = vmatprep.subr.bf16.mxu0 0
    %653 = vmatpush1.bf16.msra.mxu0 %v618
    %654 = vmatprep.subr.bf16.mxu0 0
    %655 = vmatpush1.bf16.msra.mxu0 %v619
    %656 = vmatprep.subr.bf16.mxu0 0
    %657 = vmatpush1.bf16.msra.mxu0 %v620
    %658 = vmatprep.subr.bf16.mxu0 0
    %659 = vmatpush1.bf16.msra.mxu0 %v621
    %660 = vmatprep.subr.bf16.mxu0 0
    %661 = vmatpush1.bf16.msra.mxu0 %v622
    %662 = vmatprep.subr.bf16.mxu0 0
    %663 = vmatpush1.bf16.msra.mxu0 %v623
    %664 = vmatprep.subr.bf16.mxu0 0
    %665 = vmatpush1.bf16.msra.mxu0 %v624
    %666 = vmatprep.subr.bf16.mxu0 0
    %667 = vmatpush1.bf16.msra.mxu0 %v625
    %668 = vmatprep.subr.bf16.mxu0 0
    %669 = vmatpush1.bf16.msra.mxu0 %v626
    %670 = vmatprep.subr.bf16.mxu0 0
    %671 = vmatpush1.bf16.msra.mxu0 %v627
    %672 = vmatprep.subr.bf16.mxu0 0
    %673 = vmatpush1.bf16.msra.mxu0 %v628
    %674 = vmatprep.subr.bf16.mxu0 0
    %675 = vmatpush1.bf16.msra.mxu0 %v629
    %676 = vmatprep.subr.bf16.mxu0 0
    %677 = vmatpush1.bf16.msra.mxu0 %v630
    %678 = vmatprep.subr.bf16.mxu0 0
    %679 = vmatpush1.bf16.msra.mxu0 %v631
    %680 = vmatprep.mubr.bf16.mxu0 %v505
    %681 = vmatmul.mubr.bf16.gmra.mrb[0].mxu0 %v504
    %v682 = vpop.f32.mrb[0].mxu0
    %v683 = vadd.f32 0.0, %v682
    %v684 = vpop.f32.mrb[0].mxu0
    %v685 = vpop.f32.mrb[0].mxu0
    %v686 = vadd.f32 0.0, %v685
    %v687 = vpop.f32.mrb[0].mxu0
    %688 = vmatprep.mubr.bf16.mxu0 %v507
    %689 = vmatmul.mubr.bf16.gmra.mrb[0].mxu0 %v506
    %v690 = vpop.f32.mrb[0].mxu0
    %v691 = vadd.f32 0.0, %v690
    %v692 = vpop.f32.mrb[0].mxu0
    %v693 = vpop.f32.mrb[0].mxu0
    %v694 = vadd.f32 0.0, %v693
    %v695 = vpop.f32.mrb[0].mxu0
    %696 = vmatprep.mubr.bf16.mxu0 %v509
    %697 = vmatmul.mubr.bf16.gmra.mrb[0].mxu0 %v508
    %v698 = vpop.f32.mrb[0].mxu0
    %v699 = vadd.f32 0.0, %v698
    %v700 = vpop.f32.mrb[0].mxu0
    %v701 = vpop.f32.mrb[0].mxu0
    %v702 = vadd.f32 0.0, %v701
    %v703 = vpop.f32.mrb[0].mxu0
    %704 = vmatprep.mubr.bf16.mxu0 %v511
    %705 = vmatmul.mubr.bf16.gmra.mrb[0].mxu0 %v510
    %v706 = vpop.f32.mrb[0].mxu0
    %v707 = vadd.f32 0.0, %v706
    %v708 = vpop.f32.mrb[0].mxu0
    %v709 = vpop.f32.mrb[0].mxu0
    %v710 = vadd.f32 0.0, %v709
    %v711 = vpop.f32.mrb[0].mxu0
    %712 = vmatprep.mubr.bf16.mxu0 %v513
    %713 = vmatmul.mubr.bf16.gmra.mrb[0].mxu0 %v512
    %v714 = vpop.f32.mrb[0].mxu0
    %v715 = vadd.f32 0.0, %v714
    %v716 = vpop.f32.mrb[0].mxu0
    %v717 = vpop.f32.mrb[0].mxu0
    %v718 = vadd.f32 0.0, %v717
    %v719 = vpop.f32.mrb[0].mxu0
    %720 = vmatprep.mubr.bf16.mxu0 %v515
    %721 = vmatmul.mubr.bf16.gmra.mrb[0].mxu0 %v514
    %v722 = vpop.f32.mrb[0].mxu0
    %v723 = vadd.f32 0.0, %v722
    %v724 = vpop.f32.mrb[0].mxu0
    %v725 = vpop.f32.mrb[0].mxu0
    %v726 = vadd.f32 0.0, %v725
    %v727 = vpop.f32.mrb[0].mxu0
    %728 = vmatprep.mubr.bf16.mxu0 %v517
    %729 = vmatmul.mubr.bf16.gmra.mrb[0].mxu0 %v516
    %v730 = vpop.f32.mrb[0].mxu0
    %v731 = vadd.f32 0.0, %v730
    %v732 = vpop.f32.mrb[0].mxu0
    %v733 = vpop.f32.mrb[0].mxu0
    %v734 = vadd.f32 0.0, %v733
    %v735 = vpop.f32.mrb[0].mxu0
    %736 = vmatprep.mubr.bf16.mxu0 %v519
    %737 = vmatmul.mubr.bf16.gmra.mrb[0].mxu0 %v518
    %v738 = vpop.f32.mrb[0].mxu0
    %v739 = vadd.f32 0.0, %v738
    %v740 = vpop.f32.mrb[0].mxu0
    %v741 = vpop.f32.mrb[0].mxu0
    %v742 = vadd.f32 0.0, %v741
    %v743 = vpop.f32.mrb[0].mxu0
    %744 = vdwg.mxu0
    %v745 = vadd.f32 %v488, %v683
    %v746 = vadd.f32 %v489, %v686
    %v747 = vadd.f32 %v490, %v691
    %v748 = vadd.f32 %v491, %v694
    %v749 = vadd.f32 %v492, %v699
    %v750 = vadd.f32 %v493, %v702
    %v751 = vadd.f32 %v494, %v707
    %v752 = vadd.f32 %v495, %v710
    %v753 = vadd.f32 %v496, %v715
    %v754 = vadd.f32 %v497, %v718
    %v755 = vadd.f32 %v498, %v723
    %v756 = vadd.f32 %v499, %v726
    %v757 = vadd.f32 %v500, %v731
    %v758 = vadd.f32 %v501, %v734
    %v759 = vadd.f32 %v502, %v739
    %v760 = vadd.f32 %v503, %v742
    %761 = vst [vmem:[#allocation2] sm:$0xff] %v745
    %762 = vst [vmem:[#allocation2 + $0x8] sm:$0xff] %v746
    %763 = vst [vmem:[#allocation2 + $0x10] sm:$0xff] %v747
    %764 = vst [vmem:[#allocation2 + $0x18] sm:$0xff] %v748
    %765 = vst [vmem:[#allocation2 + $0x20] sm:$0xff] %v749
    %766 = vst [vmem:[#allocation2 + $0x28] sm:$0xff] %v750
    %767 = vst [vmem:[#allocation2 + $0x30] sm:$0xff] %v751
    %768 = vst [vmem:[#allocation2 + $0x38] sm:$0xff] %v752
    %769 = vst [vmem:[#allocation2 + $0x40] sm:$0xff] %v753
    %770 = vst [vmem:[#allocation2 + $0x48] sm:$0xff] %v754
    %771 = vst [vmem:[#allocation2 + $0x50] sm:$0xff] %v755
    %772 = vst [vmem:[#allocation2 + $0x58] sm:$0xff] %v756
    %773 = vst [vmem:[#allocation2 + $0x60] sm:$0xff] %v757
    %774 = vst [vmem:[#allocation2 + $0x68] sm:$0xff] %v758
    %775 = vst [vmem:[#allocation2 + $0x70] sm:$0xff] %v759
    %776 = vst [vmem:[#allocation2 + $0x78] sm:$0xff] %v760
    // Predicated region
    $region38: #{tpu_custom_call.1} parent=1 // pred_check
      %p777 = pneg %p63
    $region39: #{tpu_custom_call.1} parent=1 // pred_check_branch
      %779 = sbr.rel (%p777) target = $region41
    $region40: #{tpu_custom_call.1} parent=1 // pred_region
      %v780 = vld [vmem:[#allocation2] sm:$0xff]
      %v781 = vld [vmem:[#allocation2 + $0x8] sm:$0xff]
      %v782 = vld [vmem:[#allocation2 + $0x10] sm:$0xff]
      %v783 = vld [vmem:[#allocation2 + $0x18] sm:$0xff]
      %v784 = vld [vmem:[#allocation2 + $0x20] sm:$0xff]
      %v785 = vld [vmem:[#allocation2 + $0x28] sm:$0xff]
      %v786 = vld [vmem:[#allocation2 + $0x30] sm:$0xff]
      %v787 = vld [vmem:[#allocation2 + $0x38] sm:$0xff]
      %v788 = vld [vmem:[#allocation2 + $0x40] sm:$0xff]
      %v789 = vld [vmem:[#allocation2 + $0x48] sm:$0xff]
      %v790 = vld [vmem:[#allocation2 + $0x50] sm:$0xff]
      %v791 = vld [vmem:[#allocation2 + $0x58] sm:$0xff]
      %v792 = vld [vmem:[#allocation2 + $0x60] sm:$0xff]
      %v793 = vld [vmem:[#allocation2 + $0x68] sm:$0xff]
      %v794 = vld [vmem:[#allocation2 + $0x70] sm:$0xff]
      %v795 = vld [vmem:[#allocation2 + $0x78] sm:$0xff]
      %v796 = vld [vmem:[%s4] sm:$0x1]
      %v798 = vlaneseq
      %v799 = vshrl.u32 %v798, 7
      %v800 = vsub.s32 0, %v799
      %v801 = vrot.slane %v796, %v800
      %v803 = vadd.f32 %v780, %v801
      %v804 = vadd.f32 %v781, %v801
      %v805 = vadd.f32 %v782, %v801
      %v806 = vadd.f32 %v783, %v801
      %v807 = vadd.f32 %v784, %v801
      %v808 = vadd.f32 %v785, %v801
      %v809 = vadd.f32 %v786, %v801
      %v810 = vadd.f32 %v787, %v801
      %v811 = vadd.f32 %v788, %v801
      %v812 = vadd.f32 %v789, %v801
      %v813 = vadd.f32 %v790, %v801
      %v814 = vadd.f32 %v791, %v801
      %v815 = vadd.f32 %v792, %v801
      %v816 = vadd.f32 %v793, %v801
      %v817 = vadd.f32 %v794, %v801
      %v818 = vadd.f32 %v795, %v801
      %819 = vst [vmem:[#allocation9] sm:$0xff] %v803
      %820 = vst [vmem:[#allocation9 + $0x8] sm:$0xff] %v804
      %821 = vst [vmem:[#allocation9 + $0x10] sm:$0xff] %v805
      %822 = vst [vmem:[#allocation9 + $0x18] sm:$0xff] %v806
      %823 = vst [vmem:[#allocation9 + $0x20] sm:$0xff] %v807
      %824 = vst [vmem:[#allocation9 + $0x28] sm:$0xff] %v808
      %825 = vst [vmem:[#allocation9 + $0x30] sm:$0xff] %v809
      %826 = vst [vmem:[#allocation9 + $0x38] sm:$0xff] %v810
      %827 = vst [vmem:[#allocation9 + $0x40] sm:$0xff] %v811
      %828 = vst [vmem:[#allocation9 + $0x48] sm:$0xff] %v812
      %829 = vst [vmem:[#allocation9 + $0x50] sm:$0xff] %v813
      %830 = vst [vmem:[#allocation9 + $0x58] sm:$0xff] %v814
      %831 = vst [vmem:[#allocation9 + $0x60] sm:$0xff] %v815
      %832 = vst [vmem:[#allocation9 + $0x68] sm:$0xff] %v816
      %833 = vst [vmem:[#allocation9 + $0x70] sm:$0xff] %v817
      %834 = vst [vmem:[#allocation9 + $0x78] sm:$0xff] %v818
    $region41: #{tpu_custom_call.1} parent=1 // pred_fallthru
      _
    // Predicated region
    $region42: #{tpu_custom_call.1} parent=1 // pred_check
      _
    $region43: #{tpu_custom_call.1} parent=1 // pred_check_branch
      %836 = sbr.rel (0) target = $region45
    $region44: #{tpu_custom_call.1} parent=1 // pred_region
      %s838 = ssub.s32 2048, 2048
      %839 = vsyncadd [#allocation5], %s838
      %s840 = sshll.u32 [#allocation9], 4
      %s841 = int_to_ptr.vmem [resolvable:$true] %s840
      %846 = dma.vmem_to_hbm [thread:$0]  %s841, 2048, %s5, [#allocation5], 128, 128, 8
    $region45: #{tpu_custom_call.1} parent=1 // pred_fallthru
      _
    // Predicated region
    $region46: #{tpu_custom_call.1} parent=1 // pred_check
      _
    $region47: #{tpu_custom_call.1} parent=1 // pred_check_branch
      %848 = sbr.rel (0) target = $region49
    $region48: #{tpu_custom_call.1} parent=1 // pred_region
      %849 = dma.done [#allocation5], 2048
    $region49: #{tpu_custom_call.1} parent=1 // pred_fallthru
      _
    %850 = vsyncpa [#allocation4], 1
    %851 = vsyncpa [#allocation7], 1
    %852 = vsyncpa [#allocation5], 1

</llo_original>
